<compile_context>
chip_gen: v6e
topology: v6e:2x2x1
jax: 0.10.0
libtpu: 0.0.40
codegen_flags: <defaults>
</compile_context>

<pallas_src>
import functools

import jax
import jax.numpy as jnp
from jax.experimental import pallas as pl
from jax.experimental.pallas import tpu as pltpu


def _round_up(n, m):
    return ((n + m - 1) // m) * m


def _autoencoder_kernel(x_ref,
                        w1_ref, b1_ref,
                        w2_ref, b2_ref,
                        w3_ref, b3_ref,
                        w4_ref, b4_ref,
                        out_ref,
                        *, matmul_dtype):
    """Full autoencoder forward for one (batch_tile, F) tile, resident in VMEM.

    MXU operands are cast to `matmul_dtype` (bf16 by default) with f32
    accumulation; bias add / ReLU / sigmoid stay f32 on the VPU/EUP.
    """
    x = x_ref[...].astype(matmul_dtype)

    # encoder: F -> 128 -> 64
    h = jnp.dot(x, w1_ref[...], preferred_element_type=jnp.float32) + b1_ref[...]
    h = jnp.maximum(h, 0.0).astype(matmul_dtype)
    h = jnp.dot(h, w2_ref[...], preferred_element_type=jnp.float32) + b2_ref[...]
    h = jnp.maximum(h, 0.0).astype(matmul_dtype)

    # decoder: 64 -> 128 -> F
    h = jnp.dot(h, w3_ref[...], preferred_element_type=jnp.float32) + b3_ref[...]
    h = jnp.maximum(h, 0.0).astype(matmul_dtype)
    z = jnp.dot(h, w4_ref[...], preferred_element_type=jnp.float32) + b4_ref[...]

    # sigmoid(z) = 0.5 * tanh(z/2) + 0.5  -> a single exact EUP op.
    out_ref[...] = (0.5 * jnp.tanh(0.5 * z) + 0.5).astype(out_ref.dtype)


def _choose_batch_tile(B, F, weight_bytes):
    """Pick the largest multiple-of-8 batch tile that divides B and fits VMEM."""
    vmem_budget = 24 * 1024 * 1024        # conservative under v7x's 64 MiB VMEM
    # Per row: double-buffered f32 x + out blocks, bf16 copies, f32 temporaries
    # (hidden 128/64 activations, z, sigmoid result) -> ~32 B x max(F, 128).
    per_row = 32 * max(F, 128)
    cap = (vmem_budget - 2 * weight_bytes) // per_row
    cap = int(max(8, min(cap, 1024)))     # 1024-row cap keeps v7x safe; fine on v5e/v6e
    if cap >= B:
        return B                          # whole batch in one step, no padding
    t = (cap // 8) * 8
    while t >= 8:
        if B % t == 0:
            return t                      # divides B exactly -> no batch padding
        t -= 8
    return max(8, (cap // 8) * 8)         # fallback: small padded tail


def autoencoder_forward(x, params, *, batch_tile=None, matmul_dtype=jnp.bfloat16,
                        out_dtype=None, core_parallel=False):
    """Run the autoencoder forward pass with a Pallas TPU kernel.

    x: (B, F) float32
    params: dict of w1,b1,w2,b2,w3,b3,w4,b4 with (in,out)/(1,out) layouts.
    out_dtype: output dtype (defaults to x.dtype; pass jnp.bfloat16 to halve
               output writeback on v6e/v7x if downstream tolerates it).
    core_parallel: set True on multi-TensorCore chips (v7x) to shard the batch
               grid across both cores via CORE_PARALLEL semantics.
    """
    B, F = x.shape
    out_dtype = x.dtype if out_dtype is None else out_dtype

    # bf16 (or f32) MXU operands; biases stay f32 for the f32 epilogue.
    w1 = params["w1"].astype(matmul_dtype)
    w2 = params["w2"].astype(matmul_dtype)
    w3 = params["w3"].astype(matmul_dtype)
    w4 = params["w4"].astype(matmul_dtype)
    b1, b2, b3, b4 = params["b1"], params["b2"], params["b3"], params["b4"]

    weight_bytes = sum(int(a.size) * a.dtype.itemsize
                       for a in (w1, b1, w2, b2, w3, b3, w4, b4))

    # Batch tiling: multiple of 8 (or the full batch); prefer tiles dividing B.
    if batch_tile is None:
        batch_tile = _choose_batch_tile(B, F, weight_bytes)
    else:
        batch_tile = int(batch_tile)
        batch_tile = B if batch_tile >= B else max(8, (batch_tile // 8) * 8)

    # Only pad the batch when the tile does not divide it (small tail; the
    # feature dim is never padded -- blocks use the true F extent).
    B_pad = B if B % batch_tile == 0 else _round_up(B, batch_tile)
    x_p = x if B_pad == B else jnp.zeros((B_pad, F), x.dtype).at[:B, :].set(x)

    grid = (B_pad // batch_tile,)

    def full(shape):
        # Whole-array block with a constant index_map: fetched once, resident.
        return pl.BlockSpec(shape, lambda i, _n=len(shape): (0,) * _n)

    flops = 2 * B_pad * (F * 128 + 128 * 64 + 64 * 128 + 128 * F)
    cost = pl.CostEstimate(
        flops=flops,
        transcendentals=B_pad * F,  # one tanh per output element
        bytes_accessed=(B_pad * F * x.dtype.itemsize
                        + B_pad * F * jnp.dtype(out_dtype).itemsize
                        + weight_bytes),
    )

    dim_sem = (pltpu.CORE_PARALLEL,) if core_parallel else ("parallel",)

    out = pl.pallas_call(
        functools.partial(_autoencoder_kernel, matmul_dtype=matmul_dtype),
        out_shape=jax.ShapeDtypeStruct((B_pad, F), out_dtype),
        grid_spec=pltpu.PrefetchScalarGridSpec(
            num_scalar_prefetch=0,
            grid=grid,
            in_specs=[
                pl.BlockSpec((batch_tile, F), lambda i: (i, 0)),  # x tile
                full(w1.shape), full(b1.shape),
                full(w2.shape), full(b2.shape),
                full(w3.shape), full(b3.shape),
                full(w4.shape), full(b4.shape),
            ],
            out_specs=pl.BlockSpec((batch_tile, F), lambda i: (i, 0)),
        ),
        compiler_params=pltpu.CompilerParams(
            dimension_semantics=dim_sem,
            vmem_limit_bytes=40 * 1024 * 1024),
        cost_estimate=cost,
    )(x_p, w1, b1, w2, b2, w3, b3, w4, b4)

    return out if B_pad == B else out[:B]


def init_params(num_features, key):
    """Deterministic synthetic parameter init (PyTorch-Linear-like scale)."""
    dims = [(num_features, 128), (128, 64), (64, 128), (128, num_features)]
    params = {}
    keys = jax.random.split(key, 2 * len(dims))
    for idx, (fan_in, fan_out) in enumerate(dims):
        bound = 1.0 / jnp.sqrt(jnp.float32(fan_in))
        w = jax.random.uniform(keys[2 * idx], (fan_in, fan_out),
                               minval=-bound, maxval=bound, dtype=jnp.float32)
        b = jax.random.uniform(keys[2 * idx + 1], (1, fan_out),
                               minval=-bound, maxval=bound, dtype=jnp.float32)
        params[f"w{idx + 1}"] = w
        params[f"b{idx + 1}"] = b
    return params


def reference_forward(x, params):
    h = jnp.maximum(x @ params["w1"] + params["b1"], 0.0)
    h = jnp.maximum(h @ params["w2"] + params["b2"], 0.0)
    h = jnp.maximum(h @ params["w3"] + params["b3"], 0.0)
    return jax.nn.sigmoid(h @ params["w4"] + params["b4"])


if __name__ == "__main__":
    key = jax.random.PRNGKey(0)
    k_x, k_p = jax.random.split(key)

    batch = 64
    num_features = 32

    x = jax.random.normal(k_x, (batch, num_features), dtype=jnp.float32)
    params = init_params(num_features, k_p)

    ref = reference_forward(x, params)

    # f32 MXU operands, explicit 4-step grid: structural / layout correctness.
    out_f32 = jax.block_until_ready(
        autoencoder_forward(x, params, batch_tile=16, matmul_dtype=jnp.float32))
    assert out_f32.shape == (batch, num_features)
    err_f32 = float(jnp.max(jnp.abs(out_f32 - ref)))
    assert err_f32 < 1e-4, err_f32

    # Default perf path: auto batch tile, bf16 MXU operands, f32 accumulation.
    out_bf16 = jax.block_until_ready(autoencoder_forward(x, params))
    assert out_bf16.shape == (batch, num_features)
    err_bf16 = float(jnp.max(jnp.abs(out_bf16 - ref)))
    assert err_bf16 < 3e-2, err_bf16

    # Optional reduced-precision output path (halves output writeback).
    out_lo = jax.block_until_ready(
        autoencoder_forward(x, params, out_dtype=jnp.bfloat16))
    assert out_lo.dtype == jnp.bfloat16
    err_lo = float(jnp.max(jnp.abs(out_lo.astype(jnp.float32) - ref)))
    assert err_lo < 3e-2, err_lo

    print("KERNEL_OK")
</pallas_src>

<mosaic_0001>
module attributes {stable_mosaic.version = 11 : i64} {
  func.func @_autoencoder_kernel(%arg0: i32, %arg1: memref<16x32xf32, #tpu.memory_space<vmem>>, %arg2: memref<32x128xf32, #tpu.memory_space<vmem>>, %arg3: memref<1x128xf32, #tpu.memory_space<vmem>>, %arg4: memref<128x64xf32, #tpu.memory_space<vmem>>, %arg5: memref<1x64xf32, #tpu.memory_space<vmem>>, %arg6: memref<64x128xf32, #tpu.memory_space<vmem>>, %arg7: memref<1x128xf32, #tpu.memory_space<vmem>>, %arg8: memref<128x32xf32, #tpu.memory_space<vmem>>, %arg9: memref<1x32xf32, #tpu.memory_space<vmem>>, %arg10: memref<16x32xf32, #tpu.memory_space<vmem>>) attributes {dimension_semantics = [#tpu.dimension_semantics<parallel>], iteration_bounds = array<i64: 4>, scalar_prefetch = 0 : i64, scratch_operands = 0 : i64, tpu.core_type = #tpu.core_type<tc>, window_params = [{transform_indices = @transform_0, window_bounds = array<i64: 16, 32>}, {pipeline_mode = #tpu.pipeline_mode<synchronous>, transform_indices = @transform_1, window_bounds = array<i64: 32, 128>}, {pipeline_mode = #tpu.pipeline_mode<synchronous>, transform_indices = @transform_2, window_bounds = array<i64: 1, 128>}, {pipeline_mode = #tpu.pipeline_mode<synchronous>, transform_indices = @transform_3, window_bounds = array<i64: 128, 64>}, {pipeline_mode = #tpu.pipeline_mode<synchronous>, transform_indices = @transform_4, window_bounds = array<i64: 1, 64>}, {pipeline_mode = #tpu.pipeline_mode<synchronous>, transform_indices = @transform_5, window_bounds = array<i64: 64, 128>}, {pipeline_mode = #tpu.pipeline_mode<synchronous>, transform_indices = @transform_6, window_bounds = array<i64: 1, 128>}, {pipeline_mode = #tpu.pipeline_mode<synchronous>, transform_indices = @transform_7, window_bounds = array<i64: 128, 32>}, {pipeline_mode = #tpu.pipeline_mode<synchronous>, transform_indices = @transform_8, window_bounds = array<i64: 1, 32>}, {transform_indices = @transform_9, window_bounds = array<i64: 16, 32>}]} {
    %c0 = arith.constant 0 : index
    %c0_0 = arith.constant 0 : index
    %0 = vector.load %arg1[%c0, %c0_0] : memref<16x32xf32, #tpu.memory_space<vmem>>, vector<16x32xf32>
    %c0_1 = arith.constant 0 : index
    %c0_2 = arith.constant 0 : index
    %1 = vector.load %arg2[%c0_1, %c0_2] : memref<32x128xf32, #tpu.memory_space<vmem>>, vector<32x128xf32>
    %cst = arith.constant dense<0.000000e+00> : vector<16x128xf32>
    %2 = tpu.matmul %0, %1, %cst {dimension_numbers = #tpu.dot_dimension_numbers<[1], [0], [0], [1], [0, 0, 1, 1], [], []>} : vector<16x32xf32>, vector<32x128xf32>, vector<16x128xf32> -> vector<16x128xf32>
    %c0_3 = arith.constant 0 : index
    %c0_4 = arith.constant 0 : index
    %3 = vector.load %arg3[%c0_3, %c0_4] : memref<1x128xf32, #tpu.memory_space<vmem>>, vector<1x128xf32>
    %4 = vector.broadcast %3 : vector<1x128xf32> to vector<16x128xf32>
    %5 = arith.addf %2, %4 : vector<16x128xf32>
    %cst_5 = arith.constant 0.000000e+00 : f32
    %6 = vector.broadcast %cst_5 : f32 to vector<16x128xf32>
    %7 = arith.maximumf %5, %6 : vector<16x128xf32>
    %c0_6 = arith.constant 0 : index
    %c0_7 = arith.constant 0 : index
    %8 = vector.load %arg4[%c0_6, %c0_7] : memref<128x64xf32, #tpu.memory_space<vmem>>, vector<128x64xf32>
    %cst_8 = arith.constant dense<0.000000e+00> : vector<16x64xf32>
    %9 = tpu.matmul %7, %8, %cst_8 {dimension_numbers = #tpu.dot_dimension_numbers<[1], [0], [0], [1], [0, 0, 1, 1], [], []>} : vector<16x128xf32>, vector<128x64xf32>, vector<16x64xf32> -> vector<16x64xf32>
    %c0_9 = arith.constant 0 : index
    %c0_10 = arith.constant 0 : index
    %10 = vector.load %arg5[%c0_9, %c0_10] : memref<1x64xf32, #tpu.memory_space<vmem>>, vector<1x64xf32>
    %11 = vector.broadcast %10 : vector<1x64xf32> to vector<16x64xf32>
    %12 = arith.addf %9, %11 : vector<16x64xf32>
    %cst_11 = arith.constant 0.000000e+00 : f32
    %13 = vector.broadcast %cst_11 : f32 to vector<16x64xf32>
    %14 = arith.maximumf %12, %13 : vector<16x64xf32>
    %c0_12 = arith.constant 0 : index
    %c0_13 = arith.constant 0 : index
    %15 = vector.load %arg6[%c0_12, %c0_13] : memref<64x128xf32, #tpu.memory_space<vmem>>, vector<64x128xf32>
    %cst_14 = arith.constant dense<0.000000e+00> : vector<16x128xf32>
    %16 = tpu.matmul %14, %15, %cst_14 {dimension_numbers = #tpu.dot_dimension_numbers<[1], [0], [0], [1], [0, 0, 1, 1], [], []>} : vector<16x64xf32>, vector<64x128xf32>, vector<16x128xf32> -> vector<16x128xf32>
    %c0_15 = arith.constant 0 : index
    %c0_16 = arith.constant 0 : index
    %17 = vector.load %arg7[%c0_15, %c0_16] : memref<1x128xf32, #tpu.memory_space<vmem>>, vector<1x128xf32>
    %18 = vector.broadcast %17 : vector<1x128xf32> to vector<16x128xf32>
    %19 = arith.addf %16, %18 : vector<16x128xf32>
    %cst_17 = arith.constant 0.000000e+00 : f32
    %20 = vector.broadcast %cst_17 : f32 to vector<16x128xf32>
    %21 = arith.maximumf %19, %20 : vector<16x128xf32>
    %c0_18 = arith.constant 0 : index
    %c0_19 = arith.constant 0 : index
    %22 = vector.load %arg8[%c0_18, %c0_19] : memref<128x32xf32, #tpu.memory_space<vmem>>, vector<128x32xf32>
    %cst_20 = arith.constant dense<0.000000e+00> : vector<16x32xf32>
    %23 = tpu.matmul %21, %22, %cst_20 {dimension_numbers = #tpu.dot_dimension_numbers<[1], [0], [0], [1], [0, 0, 1, 1], [], []>} : vector<16x128xf32>, vector<128x32xf32>, vector<16x32xf32> -> vector<16x32xf32>
    %c0_21 = arith.constant 0 : index
    %c0_22 = arith.constant 0 : index
    %24 = vector.load %arg9[%c0_21, %c0_22] : memref<1x32xf32, #tpu.memory_space<vmem>>, vector<1x32xf32>
    %25 = vector.broadcast %24 : vector<1x32xf32> to vector<16x32xf32>
    %26 = arith.addf %23, %25 : vector<16x32xf32>
    %cst_23 = arith.constant 5.000000e-01 : f32
    %27 = vector.broadcast %cst_23 : f32 to vector<16x32xf32>
    %28 = arith.mulf %27, %26 : vector<16x32xf32>
    %29 = math.tanh %28 : vector<16x32xf32>
    %cst_24 = arith.constant 5.000000e-01 : f32
    %30 = vector.broadcast %cst_24 : f32 to vector<16x32xf32>
    %31 = arith.mulf %30, %29 : vector<16x32xf32>
    %cst_25 = arith.constant 5.000000e-01 : f32
    %32 = vector.broadcast %cst_25 : f32 to vector<16x32xf32>
    %33 = arith.addf %31, %32 : vector<16x32xf32>
    %c0_26 = arith.constant 0 : index
    %c0_27 = arith.constant 0 : index
    %34 = vector.load %arg10[%c0_26, %c0_27] : memref<16x32xf32, #tpu.memory_space<vmem>>, vector<16x32xf32>
    tpu.vector_store %arg10[%c0_26, %c0_27], %33 {strides = array<i32>} : memref<16x32xf32, #tpu.memory_space<vmem>>, vector<16x32xf32>,
    return
  }
  func.func @transform_0(%arg0: i32) -> (i32, i32) {
    %c0_i32 = arith.constant 0 : i32
    %c0_i32_0 = arith.constant 0 : i32
    return %arg0, %c0_i32 : i32, i32
  }
  func.func @transform_1(%arg0: i32) -> (i32, i32) {
    %c0_i32 = arith.constant 0 : i32
    %c0_i32_0 = arith.constant 0 : i32
    %c0_i32_1 = arith.constant 0 : i32
    return %c0_i32, %c0_i32_0 : i32, i32
  }
  func.func @transform_2(%arg0: i32) -> (i32, i32) {
    %c0_i32 = arith.constant 0 : i32
    %c0_i32_0 = arith.constant 0 : i32
    %c0_i32_1 = arith.constant 0 : i32
    return %c0_i32, %c0_i32_0 : i32, i32
  }
  func.func @transform_3(%arg0: i32) -> (i32, i32) {
    %c0_i32 = arith.constant 0 : i32
    %c0_i32_0 = arith.constant 0 : i32
    %c0_i32_1 = arith.constant 0 : i32
    return %c0_i32, %c0_i32_0 : i32, i32
  }
  func.func @transform_4(%arg0: i32) -> (i32, i32) {
    %c0_i32 = arith.constant 0 : i32
    %c0_i32_0 = arith.constant 0 : i32
    %c0_i32_1 = arith.constant 0 : i32
    return %c0_i32, %c0_i32_0 : i32, i32
  }
  func.func @transform_5(%arg0: i32) -> (i32, i32) {
    %c0_i32 = arith.constant 0 : i32
    %c0_i32_0 = arith.constant 0 : i32
    %c0_i32_1 = arith.constant 0 : i32
    return %c0_i32, %c0_i32_0 : i32, i32
  }
  func.func @transform_6(%arg0: i32) -> (i32, i32) {
    %c0_i32 = arith.constant 0 : i32
    %c0_i32_0 = arith.constant 0 : i32
    %c0_i32_1 = arith.constant 0 : i32
    return %c0_i32, %c0_i32_0 : i32, i32
  }
  func.func @transform_7(%arg0: i32) -> (i32, i32) {
    %c0_i32 = arith.constant 0 : i32
    %c0_i32_0 = arith.constant 0 : i32
    %c0_i32_1 = arith.constant 0 : i32
    return %c0_i32, %c0_i32_0 : i32, i32
  }
  func.func @transform_8(%arg0: i32) -> (i32, i32) {
    %c0_i32 = arith.constant 0 : i32
    %c0_i32_0 = arith.constant 0 : i32
    %c0_i32_1 = arith.constant 0 : i32
    return %c0_i32, %c0_i32_0 : i32, i32
  }
  func.func @transform_9(%arg0: i32) -> (i32, i32) {
    %c0_i32 = arith.constant 0 : i32
    %c0_i32_0 = arith.constant 0 : i32
    return %arg0, %c0_i32 : i32, i32
  }
}

</mosaic_0001>

<llo_original>
// kernel: tpu_custom_call.1
$region0: #{tpu_custom_call.1}
  #allocation0 [shape = 'u32[]', space=smem, size = 0x4, offset = 0x4, fixed_abs, tag = 'smem constant byte address 0x4 - core index']
  #allocation1 [shape = 'u32[144,128]{1,0:T(1,128)}', space=vmem, size = 0x12000, scoped, tag = 'internal scratch']
  %s0 = inlined_call_operand.vmem [shape: f32[64,32], index: 0, kind: input, shape index: {}]
  %s1 = inlined_call_operand.vmem [shape: f32[32,128], index: 1, kind: input, shape index: {}]
  %s2 = inlined_call_operand.vmem [shape: f32[1,128], index: 2, kind: input, shape index: {}]
  %s3 = inlined_call_operand.vmem [shape: f32[128,64], index: 3, kind: input, shape index: {}]
  %s4 = inlined_call_operand.vmem [shape: f32[1,64], index: 4, kind: input, shape index: {}]
  %s5 = inlined_call_operand.vmem [shape: f32[64,128], index: 5, kind: input, shape index: {}]
  %s6 = inlined_call_operand.vmem [shape: f32[1,128], index: 6, kind: input, shape index: {}]
  %s7 = inlined_call_operand.vmem [shape: f32[128,32], index: 7, kind: input, shape index: {}]
  %s8 = inlined_call_operand.vmem [shape: f32[1,32], index: 8, kind: input, shape index: {}]
  %s9 = inlined_call_operand.vmem [shape: f32[64,32], index: 9, kind: output, shape index: {}]
  %s10 = sld [smem:[#allocation0]]
  $region69: #{tpu_custom_call.1} parent=0
    _
  %s12 = ssub.s32 1, %s10
  %s13 = scalar_select 0, %s12, %s10
  loop: start=0, step=1, limit=6
  $region2: #{tpu_custom_call.1} parent=0 // loop_pre_header
    _
  $region3: #{tpu_custom_call.1} parent=0 // loop_header
    %s15 = sphi 0, %s19
    %p16 = scmp.ge.s32.totalorder %s15, 6
    %s25 = sphi 0, %s27
    %s28 = sphi 0, %s25
    %s29 = sphi 0, %s28
    %s45 = sphi 0, %s29
    %s49 = sphi 0, %s49
    %s51 = sphi 0, %s49
    %s52 = sphi 0, %s51
    %s66 = sphi 0, %s52
    %s70 = sphi 0, %s70
    %s72 = sphi 0, %s70
    %s73 = sphi 0, %s72
    %s87 = sphi 0, %s73
    %s91 = sphi 0, %s91
    %s93 = sphi 0, %s91
    %s94 = sphi 0, %s93
    %s108 = sphi 0, %s94
    %s112 = sphi 0, %s112
    %s114 = sphi 0, %s112
    %s115 = sphi 0, %s114
    %s129 = sphi 0, %s115
    %s133 = sphi 0, %s133
    %s135 = sphi 0, %s133
    %s136 = sphi 0, %s135
    %s150 = sphi 0, %s136
    %s154 = sphi 0, %s154
    %s156 = sphi 0, %s154
    %s157 = sphi 0, %s156
    %s171 = sphi 0, %s157
    %s175 = sphi 0, %s175
    %s177 = sphi 0, %s175
    %s178 = sphi 0, %s177
    %s192 = sphi 0, %s178
    %s196 = sphi 0, %s196
    %s198 = sphi 0, %s196
    %s199 = sphi 0, %s198
    %s213 = sphi 0, %s199
    %s219 = sphi 0, %s221
    %s222 = sphi 0, %s219
    %s223 = sphi 0, %s222
    %s239 = sphi 0, %s223
  $region4: #{tpu_custom_call.1} parent=0 // loop_header_branch
    %18 = sbr.rel (%p16) target = $region8
  $region5: #{tpu_custom_call.1} parent=0 // loop_body
    %s20 = ssub.s32 %s15, 1
    %s21 = ssub.s32 %s15, 2
    %s22 = sadd.s32 %s15, 1
    %s23 = ssub.s32 %s15, %s22
    %p24 = scmp.eq.s32.totalorder %s23, 0
    %s26 = sadd.s32 %s25, 1
    %s27 = scalar_select %p24, %s25, %s26
    %p30 = pneg %p24
    %p31 = scmp.eq.s32.totalorder %s15, 3
    %p32 = por %p30, %p31
    %p33 = scmp.ne.s32.totalorder %s25, %s28
    %p34 = scmp.eq.s32.totalorder %s15, 0
    %p35 = por %p33, %p34
    %p36 = scmp.ne.s32.totalorder %s25, %s28
    %p37 = scmp.eq.s32.totalorder %s20, 3
    %p38 = por %p36, %p37
    %p39 = scmp.ne.s32.totalorder %s28, %s29
    %p40 = scmp.eq.s32.totalorder %s20, 0
    %p41 = por %p39, %p40
    %p42 = scmp.ne.s32.totalorder %s28, %s29
    %p43 = scmp.eq.s32.totalorder %s21, 3
    %p44 = por %p42, %p43
    %p46 = scmp.ne.s32.totalorder %s29, %s45
    %p47 = scmp.eq.s32.totalorder %s21, 0
    %p48 = por %p46, %p47
    %s50 = sadd.s32 %s49, 1
    %p53 = scmp.eq.s32.totalorder %s15, 3
    %p54 = scmp.ne.s32.totalorder %s49, %s51
    %p55 = scmp.eq.s32.totalorder %s15, 0
    %p56 = por %p54, %p55
    %p57 = scmp.ne.s32.totalorder %s49, %s51
    %p58 = scmp.eq.s32.totalorder %s20, 3
    %p59 = por %p57, %p58
    %p60 = scmp.ne.s32.totalorder %s51, %s52
    %p61 = scmp.eq.s32.totalorder %s20, 0
    %p62 = por %p60, %p61
    %p63 = scmp.ne.s32.totalorder %s51, %s52
    %p64 = scmp.eq.s32.totalorder %s21, 3
    %p65 = por %p63, %p64
    %p67 = scmp.ne.s32.totalorder %s52, %s66
    %p68 = scmp.eq.s32.totalorder %s21, 0
    %p69 = por %p67, %p68
    %s71 = sadd.s32 %s70, 1
    %p74 = scmp.eq.s32.totalorder %s15, 3
    %p75 = scmp.ne.s32.totalorder %s70, %s72
    %p76 = scmp.eq.s32.totalorder %s15, 0
    %p77 = por %p75, %p76
    %p78 = scmp.ne.s32.totalorder %s70, %s72
    %p79 = scmp.eq.s32.totalorder %s20, 3
    %p80 = por %p78, %p79
    %p81 = scmp.ne.s32.totalorder %s72, %s73
    %p82 = scmp.eq.s32.totalorder %s20, 0
    %p83 = por %p81, %p82
    %p84 = scmp.ne.s32.totalorder %s72, %s73
    %p85 = scmp.eq.s32.totalorder %s21, 3
    %p86 = por %p84, %p85
    %p88 = scmp.ne.s32.totalorder %s73, %s87
    %p89 = scmp.eq.s32.totalorder %s21, 0
    %p90 = por %p88, %p89
    %s92 = sadd.s32 %s91, 1
    %p95 = scmp.eq.s32.totalorder %s15, 3
    %p96 = scmp.ne.s32.totalorder %s91, %s93
    %p97 = scmp.eq.s32.totalorder %s15, 0
    %p98 = por %p96, %p97
    %p99 = scmp.ne.s32.totalorder %s91, %s93
    %p100 = scmp.eq.s32.totalorder %s20, 3
    %p101 = por %p99, %p100
    %p102 = scmp.ne.s32.totalorder %s93, %s94
    %p103 = scmp.eq.s32.totalorder %s20, 0
    %p104 = por %p102, %p103
    %p105 = scmp.ne.s32.totalorder %s93, %s94
    %p106 = scmp.eq.s32.totalorder %s21, 3
    %p107 = por %p105, %p106
    %p109 = scmp.ne.s32.totalorder %s94, %s108
    %p110 = scmp.eq.s32.totalorder %s21, 0
    %p111 = por %p109, %p110
    %s113 = sadd.s32 %s112, 1
    %p116 = scmp.eq.s32.totalorder %s15, 3
    %p117 = scmp.ne.s32.totalorder %s112, %s114
    %p118 = scmp.eq.s32.totalorder %s15, 0
    %p119 = por %p117, %p118
    %p120 = scmp.ne.s32.totalorder %s112, %s114
    %p121 = scmp.eq.s32.totalorder %s20, 3
    %p122 = por %p120, %p121
    %p123 = scmp.ne.s32.totalorder %s114, %s115
    %p124 = scmp.eq.s32.totalorder %s20, 0
    %p125 = por %p123, %p124
    %p126 = scmp.ne.s32.totalorder %s114, %s115
    %p127 = scmp.eq.s32.totalorder %s21, 3
    %p128 = por %p126, %p127
    %p130 = scmp.ne.s32.totalorder %s115, %s129
    %p131 = scmp.eq.s32.totalorder %s21, 0
    %p132 = por %p130, %p131
    %s134 = sadd.s32 %s133, 1
    %p137 = scmp.eq.s32.totalorder %s15, 3
    %p138 = scmp.ne.s32.totalorder %s133, %s135
    %p139 = scmp.eq.s32.totalorder %s15, 0
    %p140 = por %p138, %p139
    %p141 = scmp.ne.s32.totalorder %s133, %s135
    %p142 = scmp.eq.s32.totalorder %s20, 3
    %p143 = por %p141, %p142
    %p144 = scmp.ne.s32.totalorder %s135, %s136
    %p145 = scmp.eq.s32.totalorder %s20, 0
    %p146 = por %p144, %p145
    %p147 = scmp.ne.s32.totalorder %s135, %s136
    %p148 = scmp.eq.s32.totalorder %s21, 3
    %p149 = por %p147, %p148
    %p151 = scmp.ne.s32.totalorder %s136, %s150
    %p152 = scmp.eq.s32.totalorder %s21, 0
    %p153 = por %p151, %p152
    %s155 = sadd.s32 %s154, 1
    %p158 = scmp.eq.s32.totalorder %s15, 3
    %p159 = scmp.ne.s32.totalorder %s154, %s156
    %p160 = scmp.eq.s32.totalorder %s15, 0
    %p161 = por %p159, %p160
    %p162 = scmp.ne.s32.totalorder %s154, %s156
    %p163 = scmp.eq.s32.totalorder %s20, 3
    %p164 = por %p162, %p163
    %p165 = scmp.ne.s32.totalorder %s156, %s157
    %p166 = scmp.eq.s32.totalorder %s20, 0
    %p167 = por %p165, %p166
    %p168 = scmp.ne.s32.totalorder %s156, %s157
    %p169 = scmp.eq.s32.totalorder %s21, 3
    %p170 = por %p168, %p169
    %p172 = scmp.ne.s32.totalorder %s157, %s171
    %p173 = scmp.eq.s32.totalorder %s21, 0
    %p174 = por %p172, %p173
    %s176 = sadd.s32 %s175, 1
    %p179 = scmp.eq.s32.totalorder %s15, 3
    %p180 = scmp.ne.s32.totalorder %s175, %s177
    %p181 = scmp.eq.s32.totalorder %s15, 0
    %p182 = por %p180, %p181
    %p183 = scmp.ne.s32.totalorder %s175, %s177
    %p184 = scmp.eq.s32.totalorder %s20, 3
    %p185 = por %p183, %p184
    %p186 = scmp.ne.s32.totalorder %s177, %s178
    %p187 = scmp.eq.s32.totalorder %s20, 0
    %p188 = por %p186, %p187
    %p189 = scmp.ne.s32.totalorder %s177, %s178
    %p190 = scmp.eq.s32.totalorder %s21, 3
    %p191 = por %p189, %p190
    %p193 = scmp.ne.s32.totalorder %s178, %s192
    %p194 = scmp.eq.s32.totalorder %s21, 0
    %p195 = por %p193, %p194
    %s197 = sadd.s32 %s196, 1
    %p200 = scmp.eq.s32.totalorder %s15, 3
    %p201 = scmp.ne.s32.totalorder %s196, %s198
    %p202 = scmp.eq.s32.totalorder %s15, 0
    %p203 = por %p201, %p202
    %p204 = scmp.ne.s32.totalorder %s196, %s198
    %p205 = scmp.eq.s32.totalorder %s20, 3
    %p206 = por %p204, %p205
    %p207 = scmp.ne.s32.totalorder %s198, %s199
    %p208 = scmp.eq.s32.totalorder %s20, 0
    %p209 = por %p207, %p208
    %p210 = scmp.ne.s32.totalorder %s198, %s199
    %p211 = scmp.eq.s32.totalorder %s21, 3
    %p212 = por %p210, %p211
    %p214 = scmp.ne.s32.totalorder %s199, %s213
    %p215 = scmp.eq.s32.totalorder %s21, 0
    %p216 = por %p214, %p215
    %s217 = ssub.s32 %s15, %s22
    %p218 = scmp.eq.s32.totalorder %s217, 0
    %s220 = sadd.s32 %s219, 1
    %s221 = scalar_select %p218, %s219, %s220
    %p224 = pneg %p218
    %p225 = scmp.eq.s32.totalorder %s15, 3
    %p226 = por %p224, %p225
    %p227 = scmp.ne.s32.totalorder %s219, %s222
    %p228 = scmp.eq.s32.totalorder %s15, 0
    %p229 = por %p227, %p228
    %p230 = scmp.ne.s32.totalorder %s219, %s222
    %p231 = scmp.eq.s32.totalorder %s20, 3
    %p232 = por %p230, %p231
    %p233 = scmp.ne.s32.totalorder %s222, %s223
    %p234 = scmp.eq.s32.totalorder %s20, 0
    %p235 = por %p233, %p234
    %p236 = scmp.ne.s32.totalorder %s222, %s223
    %p237 = scmp.eq.s32.totalorder %s21, 3
    %p238 = por %p236, %p237
    %p240 = scmp.ne.s32.totalorder %s223, %s239
    %p241 = scmp.eq.s32.totalorder %s21, 0
    %p242 = por %p240, %p241
    %p243 = scmp.le.s32.totalorder 1, %s15
    %p244 = scmp.lt.s32.totalorder %s15, 5
    %p245 = pnand %p243, %p244
    %p246 = pneg %p245
    // Predicated region
    $region9: #{tpu_custom_call.1} parent=5 // pred_check
      _
    $region10: #{tpu_custom_call.1} parent=5 // pred_check_branch
      %248 = sbr.rel (%p245) target = $region12
    $region11: #{tpu_custom_call.1} parent=5 // pred_region
      %s249 = ssub.s32 %s15, 1
      // Predicated region
      $region13: #{tpu_custom_call.1} parent=11 // pred_check
        %p250 = pneg %p62
      $region14: #{tpu_custom_call.1} parent=11 // pred_check_branch
        %252 = sbr.rel (%p250) target = $region16
      $region15: #{tpu_custom_call.1} parent=11 // pred_region
        _
      $region16: #{tpu_custom_call.1} parent=11 // pred_fallthru
        _
      // Predicated region
      $region17: #{tpu_custom_call.1} parent=11 // pred_check
        %p253 = pneg %p83
      $region18: #{tpu_custom_call.1} parent=11 // pred_check_branch
        %255 = sbr.rel (%p253) target = $region20
      $region19: #{tpu_custom_call.1} parent=11 // pred_region
        _
      $region20: #{tpu_custom_call.1} parent=11 // pred_fallthru
        _
      // Predicated region
      $region21: #{tpu_custom_call.1} parent=11 // pred_check
        %p256 = pneg %p104
      $region22: #{tpu_custom_call.1} parent=11 // pred_check_branch
        %258 = sbr.rel (%p256) target = $region24
      $region23: #{tpu_custom_call.1} parent=11 // pred_region
        _
      $region24: #{tpu_custom_call.1} parent=11 // pred_fallthru
        _
      // Predicated region
      $region25: #{tpu_custom_call.1} parent=11 // pred_check
        %p259 = pneg %p125
      $region26: #{tpu_custom_call.1} parent=11 // pred_check_branch
        %261 = sbr.rel (%p259) target = $region28
      $region27: #{tpu_custom_call.1} parent=11 // pred_region
        _
      $region28: #{tpu_custom_call.1} parent=11 // pred_fallthru
        _
      // Predicated region
      $region29: #{tpu_custom_call.1} parent=11 // pred_check
        %p262 = pneg %p146
      $region30: #{tpu_custom_call.1} parent=11 // pred_check_branch
        %264 = sbr.rel (%p262) target = $region32
      $region31: #{tpu_custom_call.1} parent=11 // pred_region
        _
      $region32: #{tpu_custom_call.1} parent=11 // pred_fallthru
        _
      // Predicated region
      $region33: #{tpu_custom_call.1} parent=11 // pred_check
        %p265 = pneg %p167
      $region34: #{tpu_custom_call.1} parent=11 // pred_check_branch
        %267 = sbr.rel (%p265) target = $region36
      $region35: #{tpu_custom_call.1} parent=11 // pred_region
        _
      $region36: #{tpu_custom_call.1} parent=11 // pred_fallthru
        _
      // Predicated region
      $region37: #{tpu_custom_call.1} parent=11 // pred_check
        %p268 = pneg %p188
      $region38: #{tpu_custom_call.1} parent=11 // pred_check_branch
        %270 = sbr.rel (%p268) target = $region40
      $region39: #{tpu_custom_call.1} parent=11 // pred_region
        _
      $region40: #{tpu_custom_call.1} parent=11 // pred_fallthru
        _
      // Predicated region
      $region41: #{tpu_custom_call.1} parent=11 // pred_check
        %p271 = pneg %p209
      $region42: #{tpu_custom_call.1} parent=11 // pred_check_branch
        %273 = sbr.rel (%p271) target = $region44
      $region43: #{tpu_custom_call.1} parent=11 // pred_region
        _
      $region44: #{tpu_custom_call.1} parent=11 // pred_fallthru
        _
    $region12: #{tpu_custom_call.1} parent=5 // pred_fallthru
      _
    %p274 = scmp.lt.s32.totalorder %s15, 4
    // Predicated region
    $region45: #{tpu_custom_call.1} parent=5 // pred_check
      %p275 = pneg %p274
    $region46: #{tpu_custom_call.1} parent=5 // pred_check_branch
      %277 = sbr.rel (%p275) target = $region48
    $region47: #{tpu_custom_call.1} parent=5 // pred_region
      // Predicated region
      $region49: #{tpu_custom_call.1} parent=47 // pred_check
        %p278 = pneg %p35
      $region50: #{tpu_custom_call.1} parent=47 // pred_check_branch
        %280 = sbr.rel (%p278) target = $region52
      $region51: #{tpu_custom_call.1} parent=47 // pred_region
        %s281 = smul.u32 2, %s15
        %p282 = scmp.lt.s32.totalorder %s281, 7
        %s283 = scalar_select %p282, %s281, 7
        %s284 = smul.addr %s283, 8
        %s285 = scalar_lea.vmem %s0, %s284
        %s286 = smul.u32 2, %s15
      $region52: #{tpu_custom_call.1} parent=47 // pred_fallthru
        _
    $region48: #{tpu_custom_call.1} parent=5 // pred_fallthru
      _
    %p287 = scmp.le.s32.totalorder 1, %s15
    %p288 = scmp.lt.s32.totalorder %s15, 5
    %p289 = pnand %p287, %p288
    %p290 = pneg %p289
    // Predicated region
    $region53: #{tpu_custom_call.1} parent=5 // pred_check
      _
    $region54: #{tpu_custom_call.1} parent=5 // pred_check_branch
      %292 = sbr.rel (%p289) target = $region56
    $region55: #{tpu_custom_call.1} parent=5 // pred_region
      %s293 = ssub.s32 %s15, 1
      %s294 = smul.u32 2, %s20
      %p295 = scmp.lt.s32.totalorder %s294, 7
      %s296 = scalar_select %p295, %s294, 7
      %s297 = smul.addr %s296, 8
      %s298 = scalar_lea.vmem %s0, %s297
      %p299 = pneg %p41
      %p300 = pneg %p38
      %p301 = pneg %p62
      %p302 = pneg %p59
      %p303 = pneg %p83
      %p304 = pneg %p80
      %p305 = pneg %p104
      %p306 = pneg %p101
      %p307 = pneg %p125
      %p308 = pneg %p122
      %p309 = pneg %p146
      %p310 = pneg %p143
      %p311 = pneg %p167
      %p312 = pneg %p164
      %p313 = pneg %p188
      %p314 = pneg %p185
      %p315 = pneg %p209
      %p316 = pneg %p206
      %p317 = pneg %p235
      %p318 = pneg %p232
      %s319 = smul.u32 2, %s20
      %p320 = scmp.lt.s32.totalorder %s319, 7
      %s321 = scalar_select %p320, %s319, 7
      %s322 = smul.addr %s321, 8
      %s323 = scalar_lea.vmem %s9, %s322
      %s324 = smul.u32 2, %s20
      %p325 = scmp.lt.s32.totalorder %s324, 7
      %s326 = scalar_select %p325, %s324, 7
      %s327 = smul.addr %s326, 8
      %s328 = scalar_lea.vmem %s0, %s327
      %s329 = smul.u32 2, %s20
      %s330 = smul.u32 2, %s20
      %p331 = scmp.lt.s32.totalorder %s330, 7
      %s332 = scalar_select %p331, %s330, 7
      %s333 = smul.addr %s332, 8
      %s334 = scalar_lea.vmem %s9, %s333
      %s335 = smul.u32 2, %s20
      %v336 = vld [vmem:[%s328] sm:$0xff]
      %v337 = vld [vmem:[%s328 + $0x8] sm:$0xff]
      %v338 = vld [vmem:[%s1] sm:$0xff]
      %v339 = vld [vmem:[%s1 + $0x8] sm:$0xff]
      %v340 = vld [vmem:[%s1 + $0x10] sm:$0xff]
      %v341 = vld [vmem:[%s1 + $0x18] sm:$0xff]
      %v342 = vld [vmem:[%s2] sm:$0x1]
      %v344 = vlaneseq
      %v345 = vshrl.u32 %v344, 7
      %v346 = vsub.s32 0, %v345
      %v347 = vrot.slane %v342, %v346
      %vm349 = vcmask 261120
      %v351 = vsel %vm349, %v336, 0
      %v354 = vsel %vm349, %v337, 0
      %356 = vmatprep.subr.mxu0 0.0
      %357 = vmatpush1.msra.mxu0 0.0
      %358 = vmatprep.subr.mxu0 0.0
      %359 = vmatpush1.msra.mxu0 0.0
      %360 = vmatprep.subr.mxu0 0.0
      %361 = vmatpush1.msra.mxu0 0.0
      %362 = vmatprep.subr.mxu0 0.0
      %363 = vmatpush1.msra.mxu0 0.0
      %364 = vmatprep.subr.mxu0 0.0
      %365 = vmatpush1.msra.mxu0 0.0
      %366 = vmatprep.subr.mxu0 0.0
      %367 = vmatpush1.msra.mxu0 0.0
      %368 = vmatprep.subr.mxu0 0.0
      %369 = vmatpush1.msra.mxu0 0.0
      %370 = vmatprep.subr.mxu0 0.0
      %371 = vmatpush1.msra.mxu0 0.0
      %372 = vmatprep.subr.mxu0 0.0
      %373 = vmatpush1.msra.mxu0 0.0
      %374 = vmatprep.subr.mxu0 0.0
      %375 = vmatpush1.msra.mxu0 0.0
      %376 = vmatprep.subr.mxu0 0.0
      %377 = vmatpush1.msra.mxu0 0.0
      %378 = vmatprep.subr.mxu0 0.0
      %379 = vmatpush1.msra.mxu0 0.0
      %380 = vmatprep.subr.mxu0 0.0
      %381 = vmatpush1.msra.mxu0 %v341
      %382 = vmatprep.subr.mxu0 0.0
      %383 = vmatpush1.msra.mxu0 %v340
      %384 = vmatprep.subr.mxu0 0.0
      %385 = vmatpush1.msra.mxu0 %v339
      %386 = vmatprep.subr.mxu0 0.0
      %387 = vmatpush1.msra.mxu0 %v338
      %388 = vmatprep.subr.mxu0 0.0
      %389 = vmatpush2.msra.mxu0 0.0
      %390 = vmatprep.subr.mxu0 0.0
      %391 = vmatpush2.msra.mxu0 0.0
      %392 = vmatprep.subr.mxu0 0.0
      %393 = vmatpush2.msra.mxu0 0.0
      %394 = vmatprep.subr.mxu0 0.0
      %395 = vmatpush2.msra.mxu0 0.0
      %396 = vmatprep.subr.mxu0 0.0
      %397 = vmatpush2.msra.mxu0 0.0
      %398 = vmatprep.subr.mxu0 0.0
      %399 = vmatpush2.msra.mxu0 0.0
      %400 = vmatprep.subr.mxu0 0.0
      %401 = vmatpush2.msra.mxu0 0.0
      %402 = vmatprep.subr.mxu0 0.0
      %403 = vmatpush2.msra.mxu0 0.0
      %404 = vmatprep.subr.mxu0 0.0
      %405 = vmatpush2.msra.mxu0 0.0
      %406 = vmatprep.subr.mxu0 0.0
      %407 = vmatpush2.msra.mxu0 0.0
      %408 = vmatprep.subr.mxu0 0.0
      %409 = vmatpush2.msra.mxu0 0.0
      %410 = vmatprep.subr.mxu0 0.0
      %411 = vmatpush2.msra.mxu0 0.0
      %412 = vmatprep.subr.mxu0 0.0
      %413 = vmatpush2.msra.mxu0 0.0
      %414 = vmatprep.subr.mxu0 0.0
      %415 = vmatpush2.msra.mxu0 0.0
      %416 = vmatprep.subr.mxu0 0.0
      %417 = vmatpush2.msra.mxu0 0.0
      %418 = vmatprep.subr.mxu0 0.0
      %419 = vmatpush2.msra.mxu0 0.0
      %420 = vmatprep.mubr.f32.mxu0 0.0
      %421 = vmatmul.mubr.f32.gmra.mxu0 %v351
      %v422 = vpop.f32.mrf.mxu0
      %v423 = vadd.f32 %v347, %v422
      %v424 = vpop.f32.mrf.mxu0
      %425 = vmatprep.mubr.f32.mxu0 0.0
      %426 = vmatmul.mubr.f32.gmra.mxu0 %v354
      %v427 = vpop.f32.mrf.mxu0
      %v428 = vadd.f32 %v347, %v427
      %v429 = vpop.f32.mrf.mxu0
      %430 = vdwg.mxu0
      %v431 = vmax.f32 %v423, 0.0
      %v432 = vmax.f32 %v428, 0.0
      %v433 = vld [vmem:[%s3] sm:$0xff]
      %v434 = vld [vmem:[%s3 + $0x8] sm:$0xff]
      %v435 = vld [vmem:[%s3 + $0x10] sm:$0xff]
      %v436 = vld [vmem:[%s3 + $0x18] sm:$0xff]
      %v437 = vld [vmem:[%s3 + $0x20] sm:$0xff]
      %v438 = vld [vmem:[%s3 + $0x28] sm:$0xff]
      %v439 = vld [vmem:[%s3 + $0x30] sm:$0xff]
      %v440 = vld [vmem:[%s3 + $0x38] sm:$0xff]
      %v441 = vld [vmem:[%s3 + $0x40] sm:$0xff]
      %v442 = vld [vmem:[%s3 + $0x48] sm:$0xff]
      %v443 = vld [vmem:[%s3 + $0x50] sm:$0xff]
      %v444 = vld [vmem:[%s3 + $0x58] sm:$0xff]
      %v445 = vld [vmem:[%s3 + $0x60] sm:$0xff]
      %v446 = vld [vmem:[%s3 + $0x68] sm:$0xff]
      %v447 = vld [vmem:[%s3 + $0x70] sm:$0xff]
      %v448 = vld [vmem:[%s3 + $0x78] sm:$0xff]
      %v449 = vld [vmem:[%s4] sm:$0x1]
      %v451 = vlaneseq
      %v452 = vshrl.u32 %v451, 7
      %v453 = vsub.s32 0, %v452
      %v454 = vrot.slane %v449, %v453
      %456 = vmatprep.subr.mxu0 0.0
      %457 = vmatpush1.msra.mxu0 %v448
      %458 = vmatprep.subr.mxu0 0.0
      %459 = vmatpush1.msra.mxu0 %v447
      %460 = vmatprep.subr.mxu0 0.0
      %461 = vmatpush1.msra.mxu0 %v446
      %462 = vmatprep.subr.mxu0 0.0
      %463 = vmatpush1.msra.mxu0 %v445
      %464 = vmatprep.subr.mxu0 0.0
      %465 = vmatpush1.msra.mxu0 %v444
      %466 = vmatprep.subr.mxu0 0.0
      %467 = vmatpush1.msra.mxu0 %v443
      %468 = vmatprep.subr.mxu0 0.0
      %469 = vmatpush1.msra.mxu0 %v442
      %470 = vmatprep.subr.mxu0 0.0
      %471 = vmatpush1.msra.mxu0 %v441
      %472 = vmatprep.subr.mxu0 0.0
      %473 = vmatpush1.msra.mxu0 %v440
      %474 = vmatprep.subr.mxu0 0.0
      %475 = vmatpush1.msra.mxu0 %v439
      %476 = vmatprep.subr.mxu0 0.0
      %477 = vmatpush1.msra.mxu0 %v438
      %478 = vmatprep.subr.mxu0 0.0
      %479 = vmatpush1.msra.mxu0 %v437
      %480 = vmatprep.subr.mxu0 0.0
      %481 = vmatpush1.msra.mxu0 %v436
      %482 = vmatprep.subr.mxu0 0.0
      %483 = vmatpush1.msra.mxu0 %v435
      %484 = vmatprep.subr.mxu0 0.0
      %485 = vmatpush1.msra.mxu0 %v434
      %486 = vmatprep.subr.mxu0 0.0
      %487 = vmatpush1.msra.mxu0 %v433
      %488 = vmatprep.subr.mxu0 0.0
      %489 = vmatpush2.msra.mxu0 0.0
      %490 = vmatprep.subr.mxu0 0.0
      %491 = vmatpush2.msra.mxu0 0.0
      %492 = vmatprep.subr.mxu0 0.0
      %493 = vmatpush2.msra.mxu0 0.0
      %494 = vmatprep.subr.mxu0 0.0
      %495 = vmatpush2.msra.mxu0 0.0
      %496 = vmatprep.subr.mxu0 0.0
      %497 = vmatpush2.msra.mxu0 0.0
      %498 = vmatprep.subr.mxu0 0.0
      %499 = vmatpush2.msra.mxu0 0.0
      %500 = vmatprep.subr.mxu0 0.0
      %501 = vmatpush2.msra.mxu0 0.0
      %502 = vmatprep.subr.mxu0 0.0
      %503 = vmatpush2.msra.mxu0 0.0
      %504 = vmatprep.subr.mxu0 0.0
      %505 = vmatpush2.msra.mxu0 0.0
      %506 = vmatprep.subr.mxu0 0.0
      %507 = vmatpush2.msra.mxu0 0.0
      %508 = vmatprep.subr.mxu0 0.0
      %509 = vmatpush2.msra.mxu0 0.0
      %510 = vmatprep.subr.mxu0 0.0
      %511 = vmatpush2.msra.mxu0 0.0
      %512 = vmatprep.subr.mxu0 0.0
      %513 = vmatpush2.msra.mxu0 0.0
      %514 = vmatprep.subr.mxu0 0.0
      %515 = vmatpush2.msra.mxu0 0.0
      %516 = vmatprep.subr.mxu0 0.0
      %517 = vmatpush2.msra.mxu0 0.0
      %518 = vmatprep.subr.mxu0 0.0
      %519 = vmatpush2.msra.mxu0 0.0
      %520 = vmatprep.mubr.f32.mxu0 0.0
      %521 = vmatmul.mubr.f32.gmra.mxu0 %v431
      %v522 = vpop.f32.mrf.mxu0
      %v523 = vadd.f32 %v454, %v522
      %v524 = vpop.f32.mrf.mxu0
      %525 = vmatprep.mubr.f32.mxu0 0.0
      %526 = vmatmul.mubr.f32.gmra.mxu0 %v432
      %v527 = vpop.f32.mrf.mxu0
      %v528 = vadd.f32 %v454, %v527
      %v529 = vpop.f32.mrf.mxu0
      %530 = vdwg.mxu0
      %v531 = vmax.f32 %v523, 0.0
      %v532 = vmax.f32 %v528, 0.0
      %v533 = vld [vmem:[%s5] sm:$0xff]
      %v534 = vld [vmem:[%s5 + $0x8] sm:$0xff]
      %v535 = vld [vmem:[%s5 + $0x10] sm:$0xff]
      %v536 = vld [vmem:[%s5 + $0x18] sm:$0xff]
      %v537 = vld [vmem:[%s5 + $0x20] sm:$0xff]
      %v538 = vld [vmem:[%s5 + $0x28] sm:$0xff]
      %v539 = vld [vmem:[%s5 + $0x30] sm:$0xff]
      %v540 = vld [vmem:[%s5 + $0x38] sm:$0xff]
      %v541 = vld [vmem:[%s6] sm:$0x1]
      %v543 = vlaneseq
      %v544 = vshrl.u32 %v543, 7
      %v545 = vsub.s32 0, %v544
      %v546 = vrot.slane %v541, %v545
      %vm548 = vcmask 523264
      %v550 = vsel %vm548, %v531, 0
      %v553 = vsel %vm548, %v532, 0
      %555 = vmatprep.subr.mxu0 0.0
      %556 = vmatpush1.msra.mxu0 0.0
      %557 = vmatprep.subr.mxu0 0.0
      %558 = vmatpush1.msra.mxu0 0.0
      %559 = vmatprep.subr.mxu0 0.0
      %560 = vmatpush1.msra.mxu0 0.0
      %561 = vmatprep.subr.mxu0 0.0
      %562 = vmatpush1.msra.mxu0 0.0
      %563 = vmatprep.subr.mxu0 0.0
      %564 = vmatpush1.msra.mxu0 0.0
      %565 = vmatprep.subr.mxu0 0.0
      %566 = vmatpush1.msra.mxu0 0.0
      %567 = vmatprep.subr.mxu0 0.0
      %568 = vmatpush1.msra.mxu0 0.0
      %569 = vmatprep.subr.mxu0 0.0
      %570 = vmatpush1.msra.mxu0 0.0
      %571 = vmatprep.subr.mxu0 0.0
      %572 = vmatpush1.msra.mxu0 %v540
      %573 = vmatprep.subr.mxu0 0.0
      %574 = vmatpush1.msra.mxu0 %v539
      %575 = vmatprep.subr.mxu0 0.0
      %576 = vmatpush1.msra.mxu0 %v538
      %577 = vmatprep.subr.mxu0 0.0
      %578 = vmatpush1.msra.mxu0 %v537
      %579 = vmatprep.subr.mxu0 0.0
      %580 = vmatpush1.msra.mxu0 %v536
      %581 = vmatprep.subr.mxu0 0.0
      %582 = vmatpush1.msra.mxu0 %v535
      %583 = vmatprep.subr.mxu0 0.0
      %584 = vmatpush1.msra.mxu0 %v534
      %585 = vmatprep.subr.mxu0 0.0
      %586 = vmatpush1.msra.mxu0 %v533
      %587 = vmatprep.subr.mxu0 0.0
      %588 = vmatpush2.msra.mxu0 0.0
      %589 = vmatprep.subr.mxu0 0.0
      %590 = vmatpush2.msra.mxu0 0.0
      %591 = vmatprep.subr.mxu0 0.0
      %592 = vmatpush2.msra.mxu0 0.0
      %593 = vmatprep.subr.mxu0 0.0
      %594 = vmatpush2.msra.mxu0 0.0
      %595 = vmatprep.subr.mxu0 0.0
      %596 = vmatpush2.msra.mxu0 0.0
      %597 = vmatprep.subr.mxu0 0.0
      %598 = vmatpush2.msra.mxu0 0.0
      %599 = vmatprep.subr.mxu0 0.0
      %600 = vmatpush2.msra.mxu0 0.0
      %601 = vmatprep.subr.mxu0 0.0
      %602 = vmatpush2.msra.mxu0 0.0
      %603 = vmatprep.subr.mxu0 0.0
      %604 = vmatpush2.msra.mxu0 0.0
      %605 = vmatprep.subr.mxu0 0.0
      %606 = vmatpush2.msra.mxu0 0.0
      %607 = vmatprep.subr.mxu0 0.0
      %608 = vmatpush2.msra.mxu0 0.0
      %609 = vmatprep.subr.mxu0 0.0
      %610 = vmatpush2.msra.mxu0 0.0
      %611 = vmatprep.subr.mxu0 0.0
      %612 = vmatpush2.msra.mxu0 0.0
      %613 = vmatprep.subr.mxu0 0.0
      %614 = vmatpush2.msra.mxu0 0.0
      %615 = vmatprep.subr.mxu0 0.0
      %616 = vmatpush2.msra.mxu0 0.0
      %617 = vmatprep.subr.mxu0 0.0
      %618 = vmatpush2.msra.mxu0 0.0
      %619 = vmatprep.mubr.f32.mxu0 0.0
      %620 = vmatmul.mubr.f32.gmra.mxu0 %v550
      %v621 = vpop.f32.mrf.mxu0
      %v622 = vadd.f32 %v546, %v621
      %v623 = vpop.f32.mrf.mxu0
      %624 = vmatprep.mubr.f32.mxu0 0.0
      %625 = vmatmul.mubr.f32.gmra.mxu0 %v553
      %v626 = vpop.f32.mrf.mxu0
      %v627 = vadd.f32 %v546, %v626
      %v628 = vpop.f32.mrf.mxu0
      %629 = vdwg.mxu0
      %v630 = vmax.f32 %v622, 0.0
      %v631 = vmax.f32 %v627, 0.0
      %v632 = vld [vmem:[%s7] sm:$0xff]
      %v633 = vld [vmem:[%s7 + $0x8] sm:$0xff]
      %v634 = vld [vmem:[%s7 + $0x10] sm:$0xff]
      %v635 = vld [vmem:[%s7 + $0x18] sm:$0xff]
      %v636 = vld [vmem:[%s7 + $0x20] sm:$0xff]
      %v637 = vld [vmem:[%s7 + $0x28] sm:$0xff]
      %v638 = vld [vmem:[%s7 + $0x30] sm:$0xff]
      %v639 = vld [vmem:[%s7 + $0x38] sm:$0xff]
      %v640 = vld [vmem:[%s7 + $0x40] sm:$0xff]
      %v641 = vld [vmem:[%s7 + $0x48] sm:$0xff]
      %v642 = vld [vmem:[%s7 + $0x50] sm:$0xff]
      %v643 = vld [vmem:[%s7 + $0x58] sm:$0xff]
      %v644 = vld [vmem:[%s7 + $0x60] sm:$0xff]
      %v645 = vld [vmem:[%s7 + $0x68] sm:$0xff]
      %v646 = vld [vmem:[%s7 + $0x70] sm:$0xff]
      %v647 = vld [vmem:[%s7 + $0x78] sm:$0xff]
      %v648 = vld [vmem:[%s8] sm:$0x1]
      %v650 = vlaneseq
      %v651 = vshrl.u32 %v650, 7
      %v652 = vsub.s32 0, %v651
      %v653 = vrot.slane %v648, %v652
      %655 = vmatprep.subr.mxu0 0.0
      %656 = vmatpush1.msra.mxu0 %v647
      %657 = vmatprep.subr.mxu0 0.0
      %658 = vmatpush1.msra.mxu0 %v646
      %659 = vmatprep.subr.mxu0 0.0
      %660 = vmatpush1.msra.mxu0 %v645
      %661 = vmatprep.subr.mxu0 0.0
      %662 = vmatpush1.msra.mxu0 %v644
      %663 = vmatprep.subr.mxu0 0.0
      %664 = vmatpush1.msra.mxu0 %v643
      %665 = vmatprep.subr.mxu0 0.0
      %666 = vmatpush1.msra.mxu0 %v642
      %667 = vmatprep.subr.mxu0 0.0
      %668 = vmatpush1.msra.mxu0 %v641
      %669 = vmatprep.subr.mxu0 0.0
      %670 = vmatpush1.msra.mxu0 %v640
      %671 = vmatprep.subr.mxu0 0.0
      %672 = vmatpush1.msra.mxu0 %v639
      %673 = vmatprep.subr.mxu0 0.0
      %674 = vmatpush1.msra.mxu0 %v638
      %675 = vmatprep.subr.mxu0 0.0
      %676 = vmatpush1.msra.mxu0 %v637
      %677 = vmatprep.subr.mxu0 0.0
      %678 = vmatpush1.msra.mxu0 %v636
      %679 = vmatprep.subr.mxu0 0.0
      %680 = vmatpush1.msra.mxu0 %v635
      %681 = vmatprep.subr.mxu0 0.0
      %682 = vmatpush1.msra.mxu0 %v634
      %683 = vmatprep.subr.mxu0 0.0
      %684 = vmatpush1.msra.mxu0 %v633
      %685 = vmatprep.subr.mxu0 0.0
      %686 = vmatpush1.msra.mxu0 %v632
      %687 = vmatprep.subr.mxu0 0.0
      %688 = vmatpush2.msra.mxu0 0.0
      %689 = vmatprep.subr.mxu0 0.0
      %690 = vmatpush2.msra.mxu0 0.0
      %691 = vmatprep.subr.mxu0 0.0
      %692 = vmatpush2.msra.mxu0 0.0
      %693 = vmatprep.subr.mxu0 0.0
      %694 = vmatpush2.msra.mxu0 0.0
      %695 = vmatprep.subr.mxu0 0.0
      %696 = vmatpush2.msra.mxu0 0.0
      %697 = vmatprep.subr.mxu0 0.0
      %698 = vmatpush2.msra.mxu0 0.0
      %699 = vmatprep.subr.mxu0 0.0
      %700 = vmatpush2.msra.mxu0 0.0
      %701 = vmatprep.subr.mxu0 0.0
      %702 = vmatpush2.msra.mxu0 0.0
      %703 = vmatprep.subr.mxu0 0.0
      %704 = vmatpush2.msra.mxu0 0.0
      %705 = vmatprep.subr.mxu0 0.0
      %706 = vmatpush2.msra.mxu0 0.0
      %707 = vmatprep.subr.mxu0 0.0
      %708 = vmatpush2.msra.mxu0 0.0
      %709 = vmatprep.subr.mxu0 0.0
      %710 = vmatpush2.msra.mxu0 0.0
      %711 = vmatprep.subr.mxu0 0.0
      %712 = vmatpush2.msra.mxu0 0.0
      %713 = vmatprep.subr.mxu0 0.0
      %714 = vmatpush2.msra.mxu0 0.0
      %715 = vmatprep.subr.mxu0 0.0
      %716 = vmatpush2.msra.mxu0 0.0
      %717 = vmatprep.subr.mxu0 0.0
      %718 = vmatpush2.msra.mxu0 0.0
      %719 = vmatprep.mubr.f32.mxu0 0.0
      %720 = vmatmul.mubr.f32.gmra.mxu0 %v630
      %v721 = vpop.f32.mrf.mxu0
      %v722 = vadd.f32 %v653, %v721
      %v723 = vpop.f32.mrf.mxu0
      %724 = vmatprep.mubr.f32.mxu0 0.0
      %725 = vmatmul.mubr.f32.gmra.mxu0 %v631
      %v726 = vpop.f32.mrf.mxu0
      %v727 = vadd.f32 %v653, %v726
      %v728 = vpop.f32.mrf.mxu0
      %729 = vdwg.mxu0
      %v730 = vmul.f32 %v722, 0.5
      %v731 = vmul.f32 %v727, 0.5
      %v732 = vtanh.pop %v730
      %v733 = vtanh.pop %v731
      %v734 = vmul.f32 %v732, 0.5
      %v735 = vmul.f32 %v733, 0.5
      %v736 = vadd.f32 %v734, 0.5
      %v737 = vadd.f32 %v735, 0.5
      %738 = vst.msk [vmem:[%s334] sm:$0xff] %vm349, %v736
      %739 = vst.msk [vmem:[%s334 + $0x8] sm:$0xff] %vm349, %v737
      %s740 = smul.u32 2, %s20
      %p741 = scmp.lt.s32.totalorder %s740, 7
      %s742 = scalar_select %p741, %s740, 7
      %s743 = smul.addr %s742, 8
      %s744 = scalar_lea.vmem %s9, %s743
      // Predicated region
      $region57: #{tpu_custom_call.1} parent=55 // pred_check
        %p745 = pneg %p232
      $region58: #{tpu_custom_call.1} parent=55 // pred_check_branch
        %747 = sbr.rel (%p745) target = $region60
      $region59: #{tpu_custom_call.1} parent=55 // pred_region
        %s748 = smul.u32 2, %s20
      $region60: #{tpu_custom_call.1} parent=55 // pred_fallthru
        _
    $region56: #{tpu_custom_call.1} parent=5 // pred_fallthru
      _
    %p749 = scmp.le.s32.totalorder 2, %s15
    // Predicated region
    $region61: #{tpu_custom_call.1} parent=5 // pred_check
      %p750 = pneg %p749
    $region62: #{tpu_custom_call.1} parent=5 // pred_check_branch
      %752 = sbr.rel (%p750) target = $region64
    $region63: #{tpu_custom_call.1} parent=5 // pred_region
      %s753 = ssub.s32 %s15, 2
      // Predicated region
      $region65: #{tpu_custom_call.1} parent=63 // pred_check
        %p754 = pneg %p238
      $region66: #{tpu_custom_call.1} parent=63 // pred_check_branch
        %756 = sbr.rel (%p754) target = $region68
      $region67: #{tpu_custom_call.1} parent=63 // pred_region
        %s757 = smul.u32 2, %s21
        %p758 = scmp.lt.s32.totalorder %s757, 7
        %s759 = scalar_select %p758, %s757, 7
        %s760 = smul.addr %s759, 8
        %s761 = scalar_lea.vmem %s9, %s760
      $region68: #{tpu_custom_call.1} parent=63 // pred_fallthru
        _
    $region64: #{tpu_custom_call.1} parent=5 // pred_fallthru
      _
  $region6: #{tpu_custom_call.1} parent=0 // loop_footer
    %s19 = sadd.s32 1, %s15
  $region7: #{tpu_custom_call.1} parent=0 // loop_footer_branch
    %14 = sbr.rel target = $region3
  $region8: #{tpu_custom_call.1} parent=0 // loop_exit
    _

</llo_original>
